<compile_context>
chip_gen: v7x
topology: tpu7x:2x2x1
jax: 0.10.0
libtpu: 0.0.40
codegen_flags: <defaults>
</compile_context>

<pallas_src>
import jax
import jax.numpy as jnp
from jax.experimental import pallas as pl
from jax.experimental.pallas import tpu as pltpu

_LANE = 128
_TARGET_BLOCK_BYTES = 6 * 1024 * 1024   # ~6 MiB per block (fits 4 buffers on v7x)
_RAGGED_CHUNK_ELEMS = 64 * 1024         # (1, n)-view chunk; ~2 MiB VMEM/buffer
                                        # after (8,128) sublane padding, any dtype.


def _identity_kernel(x_ref, o_ref):
    # Pure pass-through copy of the current VMEM tile.
    o_ref[...] = x_ref[...]


def _sublane_multiple(itemsize: int) -> int:
    # Native tile is (8 * packing, 128): 8 rows for 4-byte dtypes,
    # 16 for 2-byte, 32 for 1-byte.
    return 8 * max(1, 4 // itemsize)


def _copy_rows(x2d: jax.Array) -> jax.Array:
    """Lane-dense tiled copy of a 2-D array whose cols are a multiple of 128."""
    rows, cols = x2d.shape
    itemsize = jnp.dtype(x2d.dtype).itemsize
    sub = _sublane_multiple(itemsize)

    if rows <= sub:
        # Full (possibly unaligned) sublane extent is always a legal block.
        block_rows = rows
    else:
        # Largest packing-aligned row count near the target block size ...
        tgt = max(1, _TARGET_BLOCK_BYTES // (cols * itemsize))
        tgt = max(sub, (tgt // sub) * sub)
        # ... but never fewer than 2 grid steps, so both v7x TCs get work.
        two_way = pl.cdiv(pl.cdiv(rows, 2), sub) * sub
        block_rows = min(tgt, two_way)

    grid = (pl.cdiv(rows, block_rows),)

    # in + out, double-buffered, padded-tile footprint + headroom.
    per_buf = pl.cdiv(block_rows, sub) * sub * cols * itemsize
    vmem_bytes = max(16 << 20, 4 * per_buf + (2 << 20))

    return pl.pallas_call(
        _identity_kernel,
        out_shape=jax.ShapeDtypeStruct((rows, cols), x2d.dtype),
        grid_spec=pltpu.PrefetchScalarGridSpec(
            num_scalar_prefetch=0,
            grid=grid,
            in_specs=[pl.BlockSpec((block_rows, cols), lambda i: (i, 0))],
            out_specs=pl.BlockSpec((block_rows, cols), lambda i: (i, 0)),
        ),
        compiler_params=pltpu.CompilerParams(
            dimension_semantics=("parallel",),
            vmem_limit_bytes=vmem_bytes,
        ),
        cost_estimate=pl.CostEstimate(
            flops=0, transcendentals=0,
            bytes_accessed=2 * rows * cols * itemsize,
        ),
    )(x2d)


def _copy_lanes(x1n: jax.Array) -> jax.Array:
    """Copy of a (1, n) view in lane chunks; the ragged tail is masked in-kernel."""
    n = x1n.shape[1]
    itemsize = jnp.dtype(x1n.dtype).itemsize

    if n <= _RAGGED_CHUNK_ELEMS:
        block_cols = n                    # full extent: always a legal block
    else:
        block_cols = _RAGGED_CHUNK_ELEMS  # multiple of 128; tail block masked
    grid = (pl.cdiv(n, block_cols),)

    # A (1, C) tile pads to a full (8,128) layout tile -> ~32 B VMEM per element.
    vmem_bytes = max(16 << 20, 4 * block_cols * 32 + (2 << 20))

    return pl.pallas_call(
        _identity_kernel,
        out_shape=jax.ShapeDtypeStruct((1, n), x1n.dtype),
        grid_spec=pltpu.PrefetchScalarGridSpec(
            num_scalar_prefetch=0,
            grid=grid,
            in_specs=[pl.BlockSpec((1, block_cols), lambda i: (0, i))],
            out_specs=pl.BlockSpec((1, block_cols), lambda i: (0, i)),
        ),
        compiler_params=pltpu.CompilerParams(
            dimension_semantics=("parallel",),
            vmem_limit_bytes=vmem_bytes,
        ),
        cost_estimate=pl.CostEstimate(
            flops=0, transcendentals=0, bytes_accessed=2 * n * itemsize,
        ),
    )(x1n)


def identity(x: jax.Array, *, materialize: bool = True) -> jax.Array:
    """Identity forward pass: returns x unchanged (same shape, dtype, values).

    materialize=False returns x itself — zero HBM traffic, the true optimum
    whenever the caller can simply keep (or donate) the input buffer.
    materialize=True produces a fresh output buffer via a Pallas copy kernel
    (the unavoidable 2N-byte cost of a non-donated identity through XLA).
    """
    if not materialize or x.size == 0:
        return x

    orig_shape = x.shape
    n = x.size

    # Fast path: metadata-only view as a wide, lane-dense 2-D slab.
    for cols in (1024, 512, 256, _LANE):
        if n % cols == 0:
            out = _copy_rows(jnp.reshape(x, (n // cols, cols)))
            return jnp.reshape(out, orig_shape)

    # Ragged path: element count not a multiple of 128.  No jnp.pad / slice —
    # view as (1, n) and let Pallas mask the overhanging tail in-kernel.
    out = _copy_lanes(jnp.reshape(x, (1, n)))
    return jnp.reshape(out, orig_shape)


if __name__ == "__main__":
    key = jax.random.PRNGKey(0)
    x = jax.random.normal(key, (2, 4, 16, 16), dtype=jnp.float32)

    # Pallas copy kernel path (fresh output buffer).
    y = identity(x)
    jax.block_until_ready(y)
    assert y.shape == x.shape, (y.shape, x.shape)
    assert y.dtype == x.dtype, (y.dtype, x.dtype)
    assert bool(jnp.all(y == x)), "identity output mismatch"

    # True no-op path (zero bytes moved) for the donated / pass-through case.
    y0 = identity(x, materialize=False)
    assert y0 is x

    print("KERNEL_OK")
</pallas_src>

<mosaic_0001>
module attributes {stable_mosaic.version = 11 : i64} {
  func.func @_identity_kernel(%arg0: i32, %arg1: memref<2x1024xf32, #tpu.memory_space<vmem>>, %arg2: memref<2x1024xf32, #tpu.memory_space<vmem>>) attributes {dimension_semantics = [#tpu.dimension_semantics<parallel>], iteration_bounds = array<i64: 1>, scalar_prefetch = 0 : i64, scratch_operands = 0 : i64, tpu.core_type = #tpu.core_type<tc>, window_params = [{transform_indices = @transform_0, window_bounds = array<i64: 2, 1024>}, {transform_indices = @transform_1, window_bounds = array<i64: 2, 1024>}]} {
    %c0 = arith.constant 0 : index
    %c0_0 = arith.constant 0 : index
    %0 = vector.load %arg1[%c0, %c0_0] : memref<2x1024xf32, #tpu.memory_space<vmem>>, vector<2x1024xf32>
    %c0_1 = arith.constant 0 : index
    %c0_2 = arith.constant 0 : index
    %1 = vector.load %arg2[%c0_1, %c0_2] : memref<2x1024xf32, #tpu.memory_space<vmem>>, vector<2x1024xf32>
    tpu.vector_store %arg2[%c0_1, %c0_2], %0 {strides = array<i32>} : memref<2x1024xf32, #tpu.memory_space<vmem>>, vector<2x1024xf32>,
    return
  }
  func.func @transform_0(%arg0: i32) -> (i32, i32) {
    %c0_i32 = arith.constant 0 : i32
    %c0_i32_0 = arith.constant 0 : i32
    return %arg0, %c0_i32 : i32, i32
  }
  func.func @transform_1(%arg0: i32) -> (i32, i32) {
    %c0_i32 = arith.constant 0 : i32
    %c0_i32_0 = arith.constant 0 : i32
    return %arg0, %c0_i32 : i32, i32
  }
}

</mosaic_0001>

<llo_original>
// kernel: tpu_custom_call.1
$region0: #{tpu_custom_call.1}
  #allocation0 [shape = 'u32[]', space=smem, size = 0x4, offset = 0x4, fixed_abs, tag = 'smem constant byte address 0x4 - core index']
  #allocation1 [shape = 'u32[144,128]{1,0:T(1,128)}', space=vmem, size = 0x12000, scoped, tag = 'internal scratch']
  %s0 = inlined_call_operand.hbm [shape: f32[2,1024], index: 0, kind: input, shape index: {}]
  %s1 = inlined_call_operand.hbm [shape: f32[2,1024], index: 1, kind: output, shape index: {}]
  %s2 = sld [smem:[#allocation0]]
  $region18: #{tpu_custom_call.1} parent=0
    _
  %s4 = ssub.s32 1, %s2
  %s5 = scalar_select 0, %s4, %s2
  $region1: #{tpu_custom_call.1} parent=0
    #allocation2 [shape = 'u8[8192]{0}', space=vmem, size = 0x2000, scoped, tag = 'input window, operand 0, single buffered']
    #allocation3 [shape = 's32[1]{0}', space=sflag, size = 0x4, scoped, tag = 'scoped memory for tpu_custom_call.1']
    #allocation4 [shape = 's32[1]{0}', space=sflag, size = 0x4, scoped, tag = 'scoped memory for tpu_custom_call.1']
    #allocation5 [shape = 'u8[8192]{0}', space=vmem, size = 0x2000, scoped, tag = 'output window, operand 0, single buffered']
    %6 = vsyncpa [#allocation3], 0
    %7 = vsyncpa [#allocation4], 0
    // Predicated region
    $region2: #{tpu_custom_call.1} parent=1 // pred_check
      _
    $region3: #{tpu_custom_call.1} parent=1 // pred_check_branch
      %9 = sbr.rel (0) target = $region5
    $region4: #{tpu_custom_call.1} parent=1 // pred_region
      %s11 = ssub.s32 256, 256
      %12 = vsyncadd [#allocation3], %s11
      %s14 = sshll.u32 [#allocation2], 4
      %s15 = int_to_ptr.vmem [resolvable:$true] %s14
      %17 = dma.hbm_to_vmem [thread:$0]  %s0, 256, %s15, [#allocation3]
    $region5: #{tpu_custom_call.1} parent=1 // pred_fallthru
      _
    // Predicated region
    $region6: #{tpu_custom_call.1} parent=1 // pred_check
      _
    $region7: #{tpu_custom_call.1} parent=1 // pred_check_branch
      %19 = sbr.rel (0) target = $region9
    $region8: #{tpu_custom_call.1} parent=1 // pred_region
      %20 = dma.done [#allocation3], 256
    $region9: #{tpu_custom_call.1} parent=1 // pred_fallthru
      _
    %v21 = vld [vmem:[#allocation2] sm:$0xff]
    %v22 = vld [vmem:[#allocation2 + $0x8] sm:$0xff]
    %23 = vst [vmem:[#allocation5] sm:$0xff] %v21
    %24 = vst [vmem:[#allocation5 + $0x8] sm:$0xff] %v22
    // Predicated region
    $region10: #{tpu_custom_call.1} parent=1 // pred_check
      _
    $region11: #{tpu_custom_call.1} parent=1 // pred_check_branch
      %26 = sbr.rel (0) target = $region13
    $region12: #{tpu_custom_call.1} parent=1 // pred_region
      %s28 = ssub.s32 256, 256
      %29 = vsyncadd [#allocation4], %s28
      %s31 = sshll.u32 [#allocation5], 4
      %s32 = int_to_ptr.vmem [resolvable:$true] %s31
      %34 = dma.vmem_to_hbm [thread:$0]  %s32, 256, %s1, [#allocation4]
    $region13: #{tpu_custom_call.1} parent=1 // pred_fallthru
      _
    // Predicated region
    $region14: #{tpu_custom_call.1} parent=1 // pred_check
      _
    $region15: #{tpu_custom_call.1} parent=1 // pred_check_branch
      %36 = sbr.rel (0) target = $region17
    $region16: #{tpu_custom_call.1} parent=1 // pred_region
      %37 = dma.done [#allocation4], 256
    $region17: #{tpu_custom_call.1} parent=1 // pred_fallthru
      _
    %38 = vsyncpa [#allocation3], 1
    %39 = vsyncpa [#allocation4], 1

</llo_original>
